<compile_context>
chip_gen: v7x
topology: tpu7x:2x2x1
jax: 0.10.0
libtpu: 0.0.40
codegen_flags: <defaults>
</compile_context>

<pallas_src>
import functools
import math

import jax
import jax.numpy as jnp
from jax import lax
from jax.experimental import pallas as pl
from jax.experimental.pallas import tpu as pltpu

SIGMA = 7.0
RF_DIM = 500            # true random-feature count (matches the PyTorch module)
RF_PAD = 512            # lane-padded to a multiple of 128; extra lanes masked in the sum
_TWO_PI = 2.0 * math.pi


def interpolate(start_val, end_val, start_iter, end_iter, current_iter):
    """Traced-safe linear annealing (works with Python ints or JAX arrays)."""
    denom = float(max(end_iter - start_iter, 1))
    t = (jnp.asarray(current_iter, jnp.float32) - float(start_iter)) / denom
    t = jnp.clip(t, 0.0, 1.0)
    return start_val + (end_val - start_val) * t


def _wae_mmd_kernel(scale_ref, z_ref, zp_ref, w_ref, b_ref, out_ref):
    r = w_ref.shape[-1]
    inv_sigma = 1.0 / SIGMA

    # Two small MXU dots (no zero-block MACs, no VMEM scratch round-trip).
    # 1/sigma is folded into the tiny (B, D) left operands.
    s1 = jnp.dot(z_ref[...] * inv_sigma, w_ref[0],
                 preferred_element_type=jnp.float32)                 # (B, R)
    s2 = jnp.dot(zp_ref[...] * inv_sigma, w_ref[1],
                 preferred_element_type=jnp.float32)                 # (B, R)

    # cos features; sqrt(2/rf_dim) and 1/B are factored out into `scale`.
    diff = jnp.cos(s1 + b_ref[0]) - jnp.cos(s2 + b_ref[1])           # (B, R)
    sum_diff = jnp.sum(diff, axis=0, keepdims=True)                  # (1, R)

    # Mask the padded lanes (>= RF_DIM), one squared-sum, one scalar scale.
    lane = lax.broadcasted_iota(jnp.int32, (1, r), 1)
    sq = jnp.where(lane < RF_DIM, sum_diff * sum_diff, 0.0)
    out_ref[0, 0] = scale_ref[0] * jnp.sum(sq)


def _wae_mmd_pallas(scale, z, z_prior, rf_w, rf_b):
    smem = pl.BlockSpec(memory_space=pltpu.MemorySpace.SMEM)
    vmem = pl.BlockSpec(memory_space=pltpu.MemorySpace.VMEM)
    out = pl.pallas_call(
        _wae_mmd_kernel,
        out_shape=jax.ShapeDtypeStruct((1, 1), jnp.float32),
        in_specs=[smem, vmem, vmem, vmem, vmem],
        out_specs=pl.BlockSpec(memory_space=pltpu.MemorySpace.SMEM),
    )(scale, z, z_prior, rf_w, rf_b)
    return out[0, 0]


@functools.partial(jax.jit, static_argnames=("n_iter",))
def _loss_wae_impl(z, global_step, rng_key, n_iter):
    z = z.astype(jnp.float32)
    b, d = z.shape
    beta = interpolate(1.0, 2.0, 0, n_iter, global_step)

    # Fresh samples every forward, like torch.randn / torch.rand in the module.
    k_prior, k_w, k_b = jax.random.split(rng_key, 3)
    z_prior = jax.random.normal(k_prior, (b, d), dtype=jnp.float32)
    # One stacked draw per kind: index 0 acts on z, index 1 on z_prior.
    rf_w = jax.random.normal(k_w, (2, d, RF_PAD), dtype=jnp.float32)
    rf_b = _TWO_PI * jax.random.uniform(k_b, (2, 1, RF_PAD), dtype=jnp.float32)

    # beta * (2/rf_dim) * (1/B)^2 folded into a single scalar applied once in-kernel.
    scale = jnp.reshape(beta * (2.0 / RF_DIM) / float(b * b), (1,)).astype(jnp.float32)
    return _wae_mmd_pallas(scale, z, z_prior, rf_w, rf_b)


def loss_wae_forward(batch_dict, z_name="z", n_iter=10, rng_key=None):
    """Mirrors LossWAE(z=z_name, n_iter=n_iter).forward(batch_dict).

    NOTE: thread a fresh rng_key every step; the PRNGKey(0) default would reuse the
    same z_prior / random features each call (unlike torch's fresh sampling).
    """
    if rng_key is None:
        rng_key = jax.random.PRNGKey(0)
    return _loss_wae_impl(batch_dict[z_name], batch_dict["global_step"], rng_key, n_iter)


if __name__ == "__main__":
    key = jax.random.PRNGKey(0)
    k_z, k_rf = jax.random.split(key)

    B, D = 8, 16  # small latent batch consistent with z: (batch, latent_dim)
    z = jax.random.normal(k_z, (B, D), dtype=jnp.float32)
    batch_dict = {"z": z, "global_step": 3}

    loss = loss_wae_forward(batch_dict, z_name="z", n_iter=10, rng_key=k_rf)
    loss = jax.block_until_ready(loss)
    assert loss.shape == () and bool(jnp.isfinite(loss))
    print("KERNEL_OK")
</pallas_src>

<mosaic_0001>
module attributes {stable_mosaic.version = 11 : i64} {
  func.func @_wae_mmd_kernel(%arg0: memref<1xf32, #tpu.memory_space<smem>>, %arg1: memref<8x16xf32, #tpu.memory_space<vmem>>, %arg2: memref<8x16xf32, #tpu.memory_space<vmem>>, %arg3: memref<2x16x512xf32, #tpu.memory_space<vmem>>, %arg4: memref<2x1x512xf32, #tpu.memory_space<vmem>>, %arg5: memref<1x1xf32, #tpu.memory_space<smem>>) attributes {dimension_semantics = [], scalar_prefetch = 0 : i64, scratch_operands = 0 : i64, tpu.core_type = #tpu.core_type<tc>} {
    %c0 = arith.constant 0 : index
    %c0_0 = arith.constant 0 : index
    %0 = vector.load %arg1[%c0, %c0_0] : memref<8x16xf32, #tpu.memory_space<vmem>>, vector<8x16xf32>
    %cst = arith.constant 0.142857149 : f32
    %1 = vector.broadcast %cst : f32 to vector<8x16xf32>
    %2 = arith.mulf %0, %1 : vector<8x16xf32>
    %c0_1 = arith.constant 0 : index
    %c0_2 = arith.constant 0 : index
    %c0_3 = arith.constant 0 : index
    %3 = vector.load %arg3[%c0_1, %c0_2, %c0_3] : memref<2x16x512xf32, #tpu.memory_space<vmem>>, vector<1x16x512xf32>
    %4 = vector.shape_cast %3 : vector<1x16x512xf32> to vector<16x512xf32>
    %cst_4 = arith.constant dense<0.000000e+00> : vector<8x512xf32>
    %5 = tpu.matmul %2, %4, %cst_4 {dimension_numbers = #tpu.dot_dimension_numbers<[1], [0], [0], [1], [0, 0, 1, 1], [], []>} : vector<8x16xf32>, vector<16x512xf32>, vector<8x512xf32> -> vector<8x512xf32>
    %c0_5 = arith.constant 0 : index
    %c0_6 = arith.constant 0 : index
    %6 = vector.load %arg2[%c0_5, %c0_6] : memref<8x16xf32, #tpu.memory_space<vmem>>, vector<8x16xf32>
    %cst_7 = arith.constant 0.142857149 : f32
    %7 = vector.broadcast %cst_7 : f32 to vector<8x16xf32>
    %8 = arith.mulf %6, %7 : vector<8x16xf32>
    %c1 = arith.constant 1 : index
    %c0_8 = arith.constant 0 : index
    %c0_9 = arith.constant 0 : index
    %9 = vector.load %arg3[%c1, %c0_8, %c0_9] : memref<2x16x512xf32, #tpu.memory_space<vmem>>, vector<1x16x512xf32>
    %10 = vector.shape_cast %9 : vector<1x16x512xf32> to vector<16x512xf32>
    %cst_10 = arith.constant dense<0.000000e+00> : vector<8x512xf32>
    %11 = tpu.matmul %8, %10, %cst_10 {dimension_numbers = #tpu.dot_dimension_numbers<[1], [0], [0], [1], [0, 0, 1, 1], [], []>} : vector<8x16xf32>, vector<16x512xf32>, vector<8x512xf32> -> vector<8x512xf32>
    %c0_11 = arith.constant 0 : index
    %c0_12 = arith.constant 0 : index
    %c0_13 = arith.constant 0 : index
    %12 = vector.load %arg4[%c0_11, %c0_12, %c0_13] : memref<2x1x512xf32, #tpu.memory_space<vmem>>, vector<1x1x512xf32>
    %13 = vector.shape_cast %12 : vector<1x1x512xf32> to vector<1x512xf32>
    %14 = vector.broadcast %13 : vector<1x512xf32> to vector<8x512xf32>
    %15 = arith.addf %5, %14 : vector<8x512xf32>
    %16 = math.cos %15 : vector<8x512xf32>
    %c1_14 = arith.constant 1 : index
    %c0_15 = arith.constant 0 : index
    %c0_16 = arith.constant 0 : index
    %17 = vector.load %arg4[%c1_14, %c0_15, %c0_16] : memref<2x1x512xf32, #tpu.memory_space<vmem>>, vector<1x1x512xf32>
    %18 = vector.shape_cast %17 : vector<1x1x512xf32> to vector<1x512xf32>
    %19 = vector.broadcast %18 : vector<1x512xf32> to vector<8x512xf32>
    %20 = arith.addf %11, %19 : vector<8x512xf32>
    %21 = math.cos %20 : vector<8x512xf32>
    %22 = arith.subf %16, %21 : vector<8x512xf32>
    %cst_17 = arith.constant dense<0.000000e+00> : vector<512xf32>
    %23 = vector.multi_reduction <add>, %22, %cst_17 [0] : vector<8x512xf32> to vector<512xf32>
    %24 = vector.shape_cast %23 : vector<512xf32> to vector<1x512xf32>
    %25 = tpu.iota {dimensions = array<i32: 1>} : vector<1x512xi32>
    %c500_i32 = arith.constant 500 : i32
    %26 = vector.broadcast %c500_i32 : i32 to vector<1x512xi32>
    %27 = arith.cmpi slt, %25, %26 : vector<1x512xi32>
    %28 = arith.mulf %24, %24 : vector<1x512xf32>
    %cst_18 = arith.constant 0.000000e+00 : f32
    %29 = vector.broadcast %cst_18 : f32 to vector<1x512xf32>
    %30 = arith.select %27, %28, %29 : vector<1x512xi1>, vector<1x512xf32>
    %c0_19 = arith.constant 0 : index
    %31 = memref.load %arg0[%c0_19] : memref<1xf32, #tpu.memory_space<smem>>
    %32 = vector.shape_cast %30 : vector<1x512xf32> to vector<1x1x512xf32>
    %cst_20 = arith.constant dense<0.000000e+00> : vector<1xf32>
    %33 = vector.multi_reduction <add>, %32, %cst_20 [1, 2] : vector<1x1x512xf32> to vector<1xf32>
    %34 = vector.shape_cast %33 : vector<1xf32> to vector<1x1x1xf32>
    %35 = vector.extract %34[0, 0, 0] : f32 from vector<1x1x1xf32>
    %36 = arith.mulf %31, %35 : f32
    %c0_21 = arith.constant 0 : index
    %c0_22 = arith.constant 0 : index
    %37 = memref.load %arg5[%c0_21, %c0_22] : memref<1x1xf32, #tpu.memory_space<smem>>
    memref.store %36, %arg5[%c0_21, %c0_22] : memref<1x1xf32, #tpu.memory_space<smem>>
    return
  }
}

</mosaic_0001>

<llo_original>
// kernel: _loss_wae_impl.3
$region0: #{_loss_wae_impl.3}
  #allocation0 [shape = 'u32[]', space=smem, size = 0x4, offset = 0x4, fixed_abs, tag = 'smem constant byte address 0x4 - core index']
  #allocation1 [shape = 'u32[144,128]{1,0:T(1,128)}', space=vmem, size = 0x12000, scoped, tag = 'internal scratch']
  #allocation2 [shape = 'f32[1]{0:T(128)S(6)}', space=smem, size = 0x200, scoped, tag = 'scoped memory for _loss_wae_impl.3']
  %s0 = inlined_call_operand.<no memory space> [shape: f32[1], index: 0, kind: input, shape index: {}]
  %s1 = inlined_call_operand.vmem [shape: f32[8,16], index: 1, kind: input, shape index: {}]
  %s2 = inlined_call_operand.vmem [shape: f32[8,16], index: 2, kind: input, shape index: {}]
  %s3 = inlined_call_operand.vmem [shape: f32[2,16,512], index: 3, kind: input, shape index: {}]
  %s4 = inlined_call_operand.vmem [shape: f32[2,1,512], index: 4, kind: input, shape index: {}]
  %s5 = inlined_call_operand.hbm [shape: f32[1,1], index: 5, kind: output, shape index: {}]
  %s6 = sld [smem:[#allocation0]]
  $region30: #{_loss_wae_impl.3} parent=0
    _
  %s8 = ssub.s32 1, %s6
  %s9 = scalar_select 0, %s8, %s6
  %10 = sst [smem:[#allocation2]] %s0
  $region1: #{_loss_wae_impl.3} parent=0
    #allocation3 [shape = 'u8[512]{0}', space=smem, size = 0x200, scoped, tag = 'output window, operand 0, single buffered']
    #allocation4 [shape = 's32[1]{0}', space=sflag, size = 0x4, scoped, tag = 'scoped memory for _loss_wae_impl.3']
    %11 = vsyncpa [#allocation4], 0
    // Predicated region
    $region2: #{_loss_wae_impl.3} parent=1 // pred_check
      _
    $region3: #{_loss_wae_impl.3} parent=1 // pred_check_branch
      %13 = sbr.rel (0) target = $region5
    $region4: #{_loss_wae_impl.3} parent=1 // pred_region
      _
    $region5: #{_loss_wae_impl.3} parent=1 // pred_fallthru
      _
    // Predicated region
    $region6: #{_loss_wae_impl.3} parent=1 // pred_check
      _
    $region7: #{_loss_wae_impl.3} parent=1 // pred_check_branch
      %15 = sbr.rel (0) target = $region9
    $region8: #{_loss_wae_impl.3} parent=1 // pred_region
      _
    $region9: #{_loss_wae_impl.3} parent=1 // pred_fallthru
      _
    // Predicated region
    $region10: #{_loss_wae_impl.3} parent=1 // pred_check
      _
    $region11: #{_loss_wae_impl.3} parent=1 // pred_check_branch
      %17 = sbr.rel (0) target = $region13
    $region12: #{_loss_wae_impl.3} parent=1 // pred_region
      _
    $region13: #{_loss_wae_impl.3} parent=1 // pred_fallthru
      _
    // Predicated region
    $region14: #{_loss_wae_impl.3} parent=1 // pred_check
      _
    $region15: #{_loss_wae_impl.3} parent=1 // pred_check_branch
      %19 = sbr.rel (0) target = $region17
    $region16: #{_loss_wae_impl.3} parent=1 // pred_region
      _
    $region17: #{_loss_wae_impl.3} parent=1 // pred_fallthru
      _
    // Predicated region
    $region18: #{_loss_wae_impl.3} parent=1 // pred_check
      _
    $region19: #{_loss_wae_impl.3} parent=1 // pred_check_branch
      %21 = sbr.rel (0) target = $region21
    $region20: #{_loss_wae_impl.3} parent=1 // pred_region
      _
    $region21: #{_loss_wae_impl.3} parent=1 // pred_fallthru
      _
    %v22 = vld [vmem:[%s1] sm:$0xff]
    %v23 = vmul.f32 %v22, 0.14285715
    %v24 = vld [vmem:[%s3] sm:$0xff]
    %v25 = vld [vmem:[%s3 + $0x8] sm:$0xff]
    %v26 = vld [vmem:[%s3 + $0x10] sm:$0xff]
    %v27 = vld [vmem:[%s3 + $0x18] sm:$0xff]
    %v28 = vld [vmem:[%s3 + $0x20] sm:$0xff]
    %v29 = vld [vmem:[%s3 + $0x28] sm:$0xff]
    %v30 = vld [vmem:[%s3 + $0x30] sm:$0xff]
    %v31 = vld [vmem:[%s3 + $0x38] sm:$0xff]
    %v32 = vld [vmem:[%s2] sm:$0xff]
    %v33 = vmul.f32 %v32, 0.14285715
    %s34 = scalar_lea.vmem %s3, 64
    %v35 = vld [vmem:[%s34] sm:$0xff]
    %v36 = vld [vmem:[%s34 + $0x8] sm:$0xff]
    %v37 = vld [vmem:[%s34 + $0x10] sm:$0xff]
    %v38 = vld [vmem:[%s34 + $0x18] sm:$0xff]
    %v39 = vld [vmem:[%s34 + $0x20] sm:$0xff]
    %v40 = vld [vmem:[%s34 + $0x28] sm:$0xff]
    %v41 = vld [vmem:[%s34 + $0x30] sm:$0xff]
    %v42 = vld [vmem:[%s34 + $0x38] sm:$0xff]
    %v43 = vld [vmem:[%s4] sm:$0xf]
    %v45 = vlaneseq
    %v46 = vshrl.u32 %v45, 7
    %v47 = vsub.s32 0, %v46
    %v48 = vrot.slane %v43, %v47
    %v49 = vlaneseq
    %v50 = vshrl.u32 %v49, 7
    %v51 = vsub.s32 1, %v50
    %v52 = vrot.slane %v43, %v51
    %v53 = vlaneseq
    %v54 = vshrl.u32 %v53, 7
    %v55 = vsub.s32 2, %v54
    %v56 = vrot.slane %v43, %v55
    %v57 = vlaneseq
    %v58 = vshrl.u32 %v57, 7
    %v59 = vsub.s32 3, %v58
    %v60 = vrot.slane %v43, %v59
    %vm65 = vcmask 130048
    %v67 = vsel %vm65, %v23, 0
    %69 = vmatprep.subr.mxu0 %v25
    %70 = vmatpush1.msra.mxu0 %v24
    %71 = vmatprep.subr.mxu0 %v29
    %72 = vmatpush1.msra.mxu0 %v28
    %73 = vmatprep.subr.mxu0 0.0
    %74 = vmatpush1.msra.mxu0 0.0
    %75 = vmatprep.subr.mxu0 0.0
    %76 = vmatpush1.msra.mxu0 0.0
    %77 = vmatprep.subr.mxu0 0.0
    %78 = vmatpush1.msra.mxu0 0.0
    %79 = vmatprep.subr.mxu0 0.0
    %80 = vmatpush1.msra.mxu0 0.0
    %81 = vmatprep.subr.mxu0 0.0
    %82 = vmatpush1.msra.mxu0 0.0
    %83 = vmatprep.subr.mxu0 0.0
    %84 = vmatpush1.msra.mxu0 0.0
    %85 = vmatprep.subr.mxu0 0.0
    %86 = vmatpush1.msra.mxu0 0.0
    %87 = vmatprep.subr.mxu0 0.0
    %88 = vmatpush1.msra.mxu0 0.0
    %89 = vmatprep.subr.mxu0 0.0
    %90 = vmatpush1.msra.mxu0 0.0
    %91 = vmatprep.subr.mxu0 0.0
    %92 = vmatpush1.msra.mxu0 0.0
    %93 = vmatprep.subr.mxu0 0.0
    %94 = vmatpush1.msra.mxu0 0.0
    %95 = vmatprep.subr.mxu0 0.0
    %96 = vmatpush1.msra.mxu0 0.0
    %97 = vmatprep.subr.mxu0 0.0
    %98 = vmatpush1.msra.mxu0 0.0
    %99 = vmatprep.subr.mxu0 0.0
    %100 = vmatpush1.msra.mxu0 0.0
    %101 = vmatprep.subr.mxu0 0.0
    %102 = vmatpush1.msra.mxu0 0.0
    %103 = vmatprep.subr.mxu0 0.0
    %104 = vmatpush1.msra.mxu0 0.0
    %105 = vmatprep.subr.mxu0 0.0
    %106 = vmatpush1.msra.mxu0 0.0
    %107 = vmatprep.subr.mxu0 0.0
    %108 = vmatpush1.msra.mxu0 0.0
    %109 = vmatprep.subr.mxu0 0.0
    %110 = vmatpush1.msra.mxu0 0.0
    %111 = vmatprep.subr.mxu0 0.0
    %112 = vmatpush1.msra.mxu0 0.0
    %113 = vmatprep.subr.mxu0 0.0
    %114 = vmatpush1.msra.mxu0 0.0
    %115 = vmatprep.subr.mxu0 0.0
    %116 = vmatpush1.msra.mxu0 0.0
    %117 = vmatprep.subr.mxu0 0.0
    %118 = vmatpush1.msra.mxu0 0.0
    %119 = vmatprep.subr.mxu0 0.0
    %120 = vmatpush1.msra.mxu0 0.0
    %121 = vmatprep.subr.mxu0 0.0
    %122 = vmatpush1.msra.mxu0 0.0
    %123 = vmatprep.subr.mxu0 0.0
    %124 = vmatpush1.msra.mxu0 0.0
    %125 = vmatprep.subr.mxu0 0.0
    %126 = vmatpush1.msra.mxu0 0.0
    %127 = vmatprep.subr.mxu0 0.0
    %128 = vmatpush1.msra.mxu0 0.0
    %129 = vmatprep.subr.mxu0 0.0
    %130 = vmatpush1.msra.mxu0 0.0
    %131 = vmatprep.subr.mxu0 0.0
    %132 = vmatpush1.msra.mxu0 0.0
    %133 = vmatprep.mubr.f32.mxu0 0.0
    %134 = vmatmul.mubr.f32.gmra.mrb[0].mxu0 %v67
    %v135 = vpop.f32.mrb[0].mxu0
    %v136 = vadd.f32 %v48, %v135
    %v137 = vpop.f32.mrb[0].mxu0
    %v138 = vadd.f32 %v52, %v137
    %139 = vdwg.mxu0
    %140 = vmatprep.subr.mxu0 %v27
    %141 = vmatpush1.msra.mxu0 %v26
    %142 = vmatprep.subr.mxu0 %v31
    %143 = vmatpush1.msra.mxu0 %v30
    %144 = vmatprep.subr.mxu0 0.0
    %145 = vmatpush1.msra.mxu0 0.0
    %146 = vmatprep.subr.mxu0 0.0
    %147 = vmatpush1.msra.mxu0 0.0
    %148 = vmatprep.subr.mxu0 0.0
    %149 = vmatpush1.msra.mxu0 0.0
    %150 = vmatprep.subr.mxu0 0.0
    %151 = vmatpush1.msra.mxu0 0.0
    %152 = vmatprep.subr.mxu0 0.0
    %153 = vmatpush1.msra.mxu0 0.0
    %154 = vmatprep.subr.mxu0 0.0
    %155 = vmatpush1.msra.mxu0 0.0
    %156 = vmatprep.subr.mxu0 0.0
    %157 = vmatpush1.msra.mxu0 0.0
    %158 = vmatprep.subr.mxu0 0.0
    %159 = vmatpush1.msra.mxu0 0.0
    %160 = vmatprep.subr.mxu0 0.0
    %161 = vmatpush1.msra.mxu0 0.0
    %162 = vmatprep.subr.mxu0 0.0
    %163 = vmatpush1.msra.mxu0 0.0
    %164 = vmatprep.subr.mxu0 0.0
    %165 = vmatpush1.msra.mxu0 0.0
    %166 = vmatprep.subr.mxu0 0.0
    %167 = vmatpush1.msra.mxu0 0.0
    %168 = vmatprep.subr.mxu0 0.0
    %169 = vmatpush1.msra.mxu0 0.0
    %170 = vmatprep.subr.mxu0 0.0
    %171 = vmatpush1.msra.mxu0 0.0
    %172 = vmatprep.subr.mxu0 0.0
    %173 = vmatpush1.msra.mxu0 0.0
    %174 = vmatprep.subr.mxu0 0.0
    %175 = vmatpush1.msra.mxu0 0.0
    %176 = vmatprep.subr.mxu0 0.0
    %177 = vmatpush1.msra.mxu0 0.0
    %178 = vmatprep.subr.mxu0 0.0
    %179 = vmatpush1.msra.mxu0 0.0
    %180 = vmatprep.subr.mxu0 0.0
    %181 = vmatpush1.msra.mxu0 0.0
    %182 = vmatprep.subr.mxu0 0.0
    %183 = vmatpush1.msra.mxu0 0.0
    %184 = vmatprep.subr.mxu0 0.0
    %185 = vmatpush1.msra.mxu0 0.0
    %186 = vmatprep.subr.mxu0 0.0
    %187 = vmatpush1.msra.mxu0 0.0
    %188 = vmatprep.subr.mxu0 0.0
    %189 = vmatpush1.msra.mxu0 0.0
    %190 = vmatprep.subr.mxu0 0.0
    %191 = vmatpush1.msra.mxu0 0.0
    %192 = vmatprep.subr.mxu0 0.0
    %193 = vmatpush1.msra.mxu0 0.0
    %194 = vmatprep.subr.mxu0 0.0
    %195 = vmatpush1.msra.mxu0 0.0
    %196 = vmatprep.subr.mxu0 0.0
    %197 = vmatpush1.msra.mxu0 0.0
    %198 = vmatprep.subr.mxu0 0.0
    %199 = vmatpush1.msra.mxu0 0.0
    %200 = vmatprep.subr.mxu0 0.0
    %201 = vmatpush1.msra.mxu0 0.0
    %202 = vmatprep.subr.mxu0 0.0
    %203 = vmatpush1.msra.mxu0 0.0
    %204 = vmatprep.mubr.f32.mxu0 0.0
    %205 = vmatmul.mubr.f32.gmra.mrb[0].mxu0 %v67
    %v206 = vpop.f32.mrb[0].mxu0
    %v207 = vadd.f32 %v56, %v206
    %v208 = vpop.f32.mrb[0].mxu0
    %v209 = vadd.f32 %v60, %v208
    %210 = vdwg.mxu0
    %v211 = vand.u32 2147483647, %v136
    %vm212 = vcmp.le.f32.partialorder %v211, 0.7853982
    %vm213 = vcmp.lt.s32.totalorder %v136, 0
    %v214 = vand.u32 %v136, 2139095040
    %v215 = vshrl.u32 %v214, 23
    %v216 = vsub.s32 %v215, 127
    %v217 = vand.u32 2147483647, %v136
    %v218 = vand.u32 %v217, 8388607
    %v219 = vor.u32 %v218, 8388608
    %v220 = vsub.s32 0, %v219
    %v221 = vadd.s32 %v216, 1
    %vm222 = vcmp.gt.s32.totalorder %v221, 0
    %v223 = vsel %vm222, %v221, 0
    %v224 = vshrl.u32 %v223, 5
    %v225 = vand.u32 %v223, 31
    %v226 = vsub.s32 32, %v225
    %v227 = vshrl.u32 683565275, %v226
    %v228 = vshll.u32 683565275, %v225
    %v229 = vshrl.u32 2475754826, %v226
    %v230 = vor.u32 %v228, %v229
    %v231 = vshll.u32 2475754826, %v225
    %v232 = vshrl.u32 2131351028, %v226
    %v233 = vor.u32 %v231, %v232
    %v234 = vshll.u32 2131351028, %v225
    %v235 = vshrl.u32 2102212464, %v226
    %v236 = vor.u32 %v234, %v235
    %v237 = vshll.u32 2102212464, %v225
    %v238 = vshrl.u32 920167782, %v226
    %v239 = vor.u32 %v237, %v238
    %v240 = vshll.u32 920167782, %v225
    %v241 = vshrl.u32 1326507024, %v226
    %v242 = vor.u32 %v240, %v241
    %vm243 = vcmp.lt.s32.totalorder %v224, 1
    %vm244 = vcmp.lt.s32.totalorder %v224, 2
    %vm245 = vcmp.lt.s32.totalorder %v224, 3
    %vm246 = vcmp.lt.s32.totalorder %v224, 4
    %v247 = vsel %vm243, %v227, %v230
    %v248 = vsel %vm246, %v236, 2102212464
    %v249 = vsel %vm245, %v233, %v248
    %v250 = vsel %vm244, %v247, %v249
    %v251 = vsel %vm243, %v230, %v233
    %v252 = vsel %vm246, %v239, 920167782
    %v253 = vsel %vm245, %v236, %v252
    %v254 = vsel %vm244, %v251, %v253
    %v255 = vsel %vm243, %v233, %v236
    %v256 = vsel %vm246, %v242, 1326507024
    %v257 = vsel %vm245, %v239, %v256
    %v258 = vsel %vm244, %v255, %v257
    %v259 = vshll.u32 %v219, 8
    %v260 = vmul.u32.u64.compose %v259, %v258
    %v261 = vextract.low.u32 %v260
    %v262 = vextract.high.u32 %v260
    %v263 = vmul.u32.u64.compose %v259, %v254
    %v264 = vextract.low.u32 %v263
    %v265 = vextract.high.u32 %v263
    %v266 = vmul.u32 %v259, %v250
    %v267 = vadd.s32 %v262, %v264
    %vm268 = vc.u32 %v262, %v264
    %v269 = vadd.s32 %v265, 1
    %v270 = vsel %vm268, %v269, %v265
    %v271 = vadd.s32 %v266, %v270
    %v272 = vadd.s32 %v271, 536870912
    %v273 = vshrl.u32 %v272, 30
    %v274 = vshll.u32 %v273, 30
    %v275 = vsub.s32 %v271, %v274
    %vm276 = vcmp.lt.s32.totalorder %v275, 0
    %v277 = vsub.s32 0, %v275
    %v278 = vsel %vm276, %v277, %v275
    %v279 = vclz %v278
    %v280 = vsub.s32 %v279, 2
    %vm281 = vcmp.gt.s32.totalorder 0, %v280
    %v282 = vsel %vm281, 0, %v280
    %v283 = vsub.s32 32, %v282
    %v284 = vshll.u32 %v275, %v282
    %v285 = vshrl.u32 %v267, %v283
    %v286 = vor.u32 %v284, %v285
    %v287 = vsub.s32 4294967266, %v282
    %v288 = vadd.s32 %v287, 127
    %v289 = vshll.u32 %v288, 23
    %v290 = vor.u32 4788187, %v289
    %v291 = vand.u32 2147483647, %v290
    %v293 = vcvt.s32.f32 %v286
    %v294 = vmul.f32 %v293, %v291
    %v295 = vxor.u32 %v294, 2147483648
    %v296 = vsel %vm213, %v295, %v294
    %v297 = vsub.s32 4, %v273
    %v298 = vsel %vm213, %v297, %v273
    %v299 = vsel %vm212, %v136, %v296
    %v300 = vsel %vm212, 0, %v298
    %v301 = vcosq.f32.pop %v299
    %v302 = vsinq.f32.pop %v299
    %vm303 = vweird.f32 %v136
    %v304 = vand.u32 %v300, 3
    %vm305 = vcmp.lt.s32.totalorder %v304, 2
    %vm306 = vcmp.eq.s32.totalorder %v304, 0
    %v307 = vxor.u32 %v302, 2147483648
    %v308 = vsel %vm306, %v301, %v307
    %vm309 = vcmp.eq.s32.totalorder %v304, 2
    %v310 = vxor.u32 %v301, 2147483648
    %v311 = vsel %vm309, %v310, %v302
    %v312 = vsel %vm305, %v308, %v311
    %v313 = vsel %vm303, nan, %v312
    %v314 = vand.u32 2147483647, %v138
    %vm315 = vcmp.le.f32.partialorder %v314, 0.7853982
    %vm316 = vcmp.lt.s32.totalorder %v138, 0
    %v317 = vand.u32 %v138, 2139095040
    %v318 = vshrl.u32 %v317, 23
    %v319 = vsub.s32 %v318, 127
    %v320 = vand.u32 2147483647, %v138
    %v321 = vand.u32 %v320, 8388607
    %v322 = vor.u32 %v321, 8388608
    %v323 = vsub.s32 0, %v322
    %v324 = vadd.s32 %v319, 1
    %vm325 = vcmp.gt.s32.totalorder %v324, 0
    %v326 = vsel %vm325, %v324, 0
    %v327 = vshrl.u32 %v326, 5
    %v328 = vand.u32 %v326, 31
    %v329 = vsub.s32 32, %v328
    %v330 = vshrl.u32 683565275, %v329
    %v331 = vshll.u32 683565275, %v328
    %v332 = vshrl.u32 2475754826, %v329
    %v333 = vor.u32 %v331, %v332
    %v334 = vshll.u32 2475754826, %v328
    %v335 = vshrl.u32 2131351028, %v329
    %v336 = vor.u32 %v334, %v335
    %v337 = vshll.u32 2131351028, %v328
    %v338 = vshrl.u32 2102212464, %v329
    %v339 = vor.u32 %v337, %v338
    %v340 = vshll.u32 2102212464, %v328
    %v341 = vshrl.u32 920167782, %v329
    %v342 = vor.u32 %v340, %v341
    %v343 = vshll.u32 920167782, %v328
    %v344 = vshrl.u32 1326507024, %v329
    %v345 = vor.u32 %v343, %v344
    %vm346 = vcmp.lt.s32.totalorder %v327, 1
    %vm347 = vcmp.lt.s32.totalorder %v327, 2
    %vm348 = vcmp.lt.s32.totalorder %v327, 3
    %vm349 = vcmp.lt.s32.totalorder %v327, 4
    %v350 = vsel %vm346, %v330, %v333
    %v351 = vsel %vm349, %v339, 2102212464
    %v352 = vsel %vm348, %v336, %v351
    %v353 = vsel %vm347, %v350, %v352
    %v354 = vsel %vm346, %v333, %v336
    %v355 = vsel %vm349, %v342, 920167782
    %v356 = vsel %vm348, %v339, %v355
    %v357 = vsel %vm347, %v354, %v356
    %v358 = vsel %vm346, %v336, %v339
    %v359 = vsel %vm349, %v345, 1326507024
    %v360 = vsel %vm348, %v342, %v359
    %v361 = vsel %vm347, %v358, %v360
    %v362 = vshll.u32 %v322, 8
    %v363 = vmul.u32.u64.compose %v362, %v361
    %v364 = vextract.low.u32 %v363
    %v365 = vextract.high.u32 %v363
    %v366 = vmul.u32.u64.compose %v362, %v357
    %v367 = vextract.low.u32 %v366
    %v368 = vextract.high.u32 %v366
    %v369 = vmul.u32 %v362, %v353
    %v370 = vadd.s32 %v365, %v367
    %vm371 = vc.u32 %v365, %v367
    %v372 = vadd.s32 %v368, 1
    %v373 = vsel %vm371, %v372, %v368
    %v374 = vadd.s32 %v369, %v373
    %v375 = vadd.s32 %v374, 536870912
    %v376 = vshrl.u32 %v375, 30
    %v377 = vshll.u32 %v376, 30
    %v378 = vsub.s32 %v374, %v377
    %vm379 = vcmp.lt.s32.totalorder %v378, 0
    %v380 = vsub.s32 0, %v378
    %v381 = vsel %vm379, %v380, %v378
    %v382 = vclz %v381
    %v383 = vsub.s32 %v382, 2
    %vm384 = vcmp.gt.s32.totalorder 0, %v383
    %v385 = vsel %vm384, 0, %v383
    %v386 = vsub.s32 32, %v385
    %v387 = vshll.u32 %v378, %v385
    %v388 = vshrl.u32 %v370, %v386
    %v389 = vor.u32 %v387, %v388
    %v390 = vsub.s32 4294967266, %v385
    %v391 = vadd.s32 %v390, 127
    %v392 = vshll.u32 %v391, 23
    %v393 = vor.u32 4788187, %v392
    %v394 = vand.u32 2147483647, %v393
    %v396 = vcvt.s32.f32 %v389
    %v397 = vmul.f32 %v396, %v394
    %v398 = vxor.u32 %v397, 2147483648
    %v399 = vsel %vm316, %v398, %v397
    %v400 = vsub.s32 4, %v376
    %v401 = vsel %vm316, %v400, %v376
    %v402 = vsel %vm315, %v138, %v399
    %v403 = vsel %vm315, 0, %v401
    %v404 = vcosq.f32.pop %v402
    %v405 = vsinq.f32.pop %v402
    %vm406 = vweird.f32 %v138
    %v407 = vand.u32 %v403, 3
    %vm408 = vcmp.lt.s32.totalorder %v407, 2
    %vm409 = vcmp.eq.s32.totalorder %v407, 0
    %v410 = vxor.u32 %v405, 2147483648
    %v411 = vsel %vm409, %v404, %v410
    %vm412 = vcmp.eq.s32.totalorder %v407, 2
    %v413 = vxor.u32 %v404, 2147483648
    %v414 = vsel %vm412, %v413, %v405
    %v415 = vsel %vm408, %v411, %v414
    %v416 = vsel %vm406, nan, %v415
    %v417 = vand.u32 2147483647, %v207
    %vm418 = vcmp.le.f32.partialorder %v417, 0.7853982
    %vm419 = vcmp.lt.s32.totalorder %v207, 0
    %v420 = vand.u32 %v207, 2139095040
    %v421 = vshrl.u32 %v420, 23
    %v422 = vsub.s32 %v421, 127
    %v423 = vand.u32 2147483647, %v207
    %v424 = vand.u32 %v423, 8388607
    %v425 = vor.u32 %v424, 8388608
    %v426 = vsub.s32 0, %v425
    %v427 = vadd.s32 %v422, 1
    %vm428 = vcmp.gt.s32.totalorder %v427, 0
    %v429 = vsel %vm428, %v427, 0
    %v430 = vshrl.u32 %v429, 5
    %v431 = vand.u32 %v429, 31
    %v432 = vsub.s32 32, %v431
    %v433 = vshrl.u32 683565275, %v432
    %v434 = vshll.u32 683565275, %v431
    %v435 = vshrl.u32 2475754826, %v432
    %v436 = vor.u32 %v434, %v435
    %v437 = vshll.u32 2475754826, %v431
    %v438 = vshrl.u32 2131351028, %v432
    %v439 = vor.u32 %v437, %v438
    %v440 = vshll.u32 2131351028, %v431
    %v441 = vshrl.u32 2102212464, %v432
    %v442 = vor.u32 %v440, %v441
    %v443 = vshll.u32 2102212464, %v431
    %v444 = vshrl.u32 920167782, %v432
    %v445 = vor.u32 %v443, %v444
    %v446 = vshll.u32 920167782, %v431
    %v447 = vshrl.u32 1326507024, %v432
    %v448 = vor.u32 %v446, %v447
    %vm449 = vcmp.lt.s32.totalorder %v430, 1
    %vm450 = vcmp.lt.s32.totalorder %v430, 2
    %vm451 = vcmp.lt.s32.totalorder %v430, 3
    %vm452 = vcmp.lt.s32.totalorder %v430, 4
    %v453 = vsel %vm449, %v433, %v436
    %v454 = vsel %vm452, %v442, 2102212464
    %v455 = vsel %vm451, %v439, %v454
    %v456 = vsel %vm450, %v453, %v455
    %v457 = vsel %vm449, %v436, %v439
    %v458 = vsel %vm452, %v445, 920167782
    %v459 = vsel %vm451, %v442, %v458
    %v460 = vsel %vm450, %v457, %v459
    %v461 = vsel %vm449, %v439, %v442
    %v462 = vsel %vm452, %v448, 1326507024
    %v463 = vsel %vm451, %v445, %v462
    %v464 = vsel %vm450, %v461, %v463
    %v465 = vshll.u32 %v425, 8
    %v466 = vmul.u32.u64.compose %v465, %v464
    %v467 = vextract.low.u32 %v466
    %v468 = vextract.high.u32 %v466
    %v469 = vmul.u32.u64.compose %v465, %v460
    %v470 = vextract.low.u32 %v469
    %v471 = vextract.high.u32 %v469
    %v472 = vmul.u32 %v465, %v456
    %v473 = vadd.s32 %v468, %v470
    %vm474 = vc.u32 %v468, %v470
    %v475 = vadd.s32 %v471, 1
    %v476 = vsel %vm474, %v475, %v471
    %v477 = vadd.s32 %v472, %v476
    %v478 = vadd.s32 %v477, 536870912
    %v479 = vshrl.u32 %v478, 30
    %v480 = vshll.u32 %v479, 30
    %v481 = vsub.s32 %v477, %v480
    %vm482 = vcmp.lt.s32.totalorder %v481, 0
    %v483 = vsub.s32 0, %v481
    %v484 = vsel %vm482, %v483, %v481
    %v485 = vclz %v484
    %v486 = vsub.s32 %v485, 2
    %vm487 = vcmp.gt.s32.totalorder 0, %v486
    %v488 = vsel %vm487, 0, %v486
    %v489 = vsub.s32 32, %v488
    %v490 = vshll.u32 %v481, %v488
    %v491 = vshrl.u32 %v473, %v489
    %v492 = vor.u32 %v490, %v491
    %v493 = vsub.s32 4294967266, %v488
    %v494 = vadd.s32 %v493, 127
    %v495 = vshll.u32 %v494, 23
    %v496 = vor.u32 4788187, %v495
    %v497 = vand.u32 2147483647, %v496
    %v499 = vcvt.s32.f32 %v492
    %v500 = vmul.f32 %v499, %v497
    %v501 = vxor.u32 %v500, 2147483648
    %v502 = vsel %vm419, %v501, %v500
    %v503 = vsub.s32 4, %v479
    %v504 = vsel %vm419, %v503, %v479
    %v505 = vsel %vm418, %v207, %v502
    %v506 = vsel %vm418, 0, %v504
    %v507 = vcosq.f32.pop %v505
    %v508 = vsinq.f32.pop %v505
    %vm509 = vweird.f32 %v207
    %v510 = vand.u32 %v506, 3
    %vm511 = vcmp.lt.s32.totalorder %v510, 2
    %vm512 = vcmp.eq.s32.totalorder %v510, 0
    %v513 = vxor.u32 %v508, 2147483648
    %v514 = vsel %vm512, %v507, %v513
    %vm515 = vcmp.eq.s32.totalorder %v510, 2
    %v516 = vxor.u32 %v507, 2147483648
    %v517 = vsel %vm515, %v516, %v508
    %v518 = vsel %vm511, %v514, %v517
    %v519 = vsel %vm509, nan, %v518
    %v520 = vand.u32 2147483647, %v209
    %vm521 = vcmp.le.f32.partialorder %v520, 0.7853982
    %vm522 = vcmp.lt.s32.totalorder %v209, 0
    %v523 = vand.u32 %v209, 2139095040
    %v524 = vshrl.u32 %v523, 23
    %v525 = vsub.s32 %v524, 127
    %v526 = vand.u32 2147483647, %v209
    %v527 = vand.u32 %v526, 8388607
    %v528 = vor.u32 %v527, 8388608
    %v529 = vsub.s32 0, %v528
    %v530 = vadd.s32 %v525, 1
    %vm531 = vcmp.gt.s32.totalorder %v530, 0
    %v532 = vsel %vm531, %v530, 0
    %v533 = vshrl.u32 %v532, 5
    %v534 = vand.u32 %v532, 31
    %v535 = vsub.s32 32, %v534
    %v536 = vshrl.u32 683565275, %v535
    %v537 = vshll.u32 683565275, %v534
    %v538 = vshrl.u32 2475754826, %v535
    %v539 = vor.u32 %v537, %v538
    %v540 = vshll.u32 2475754826, %v534
    %v541 = vshrl.u32 2131351028, %v535
    %v542 = vor.u32 %v540, %v541
    %v543 = vshll.u32 2131351028, %v534
    %v544 = vshrl.u32 2102212464, %v535
    %v545 = vor.u32 %v543, %v544
    %v546 = vshll.u32 2102212464, %v534
    %v547 = vshrl.u32 920167782, %v535
    %v548 = vor.u32 %v546, %v547
    %v549 = vshll.u32 920167782, %v534
    %v550 = vshrl.u32 1326507024, %v535
    %v551 = vor.u32 %v549, %v550
    %vm552 = vcmp.lt.s32.totalorder %v533, 1
    %vm553 = vcmp.lt.s32.totalorder %v533, 2
    %vm554 = vcmp.lt.s32.totalorder %v533, 3
    %vm555 = vcmp.lt.s32.totalorder %v533, 4
    %v556 = vsel %vm552, %v536, %v539
    %v557 = vsel %vm555, %v545, 2102212464
    %v558 = vsel %vm554, %v542, %v557
    %v559 = vsel %vm553, %v556, %v558
    %v560 = vsel %vm552, %v539, %v542
    %v561 = vsel %vm555, %v548, 920167782
    %v562 = vsel %vm554, %v545, %v561
    %v563 = vsel %vm553, %v560, %v562
    %v564 = vsel %vm552, %v542, %v545
    %v565 = vsel %vm555, %v551, 1326507024
    %v566 = vsel %vm554, %v548, %v565
    %v567 = vsel %vm553, %v564, %v566
    %v568 = vshll.u32 %v528, 8
    %v569 = vmul.u32.u64.compose %v568, %v567
    %v570 = vextract.low.u32 %v569
    %v571 = vextract.high.u32 %v569
    %v572 = vmul.u32.u64.compose %v568, %v563
    %v573 = vextract.low.u32 %v572
    %v574 = vextract.high.u32 %v572
    %v575 = vmul.u32 %v568, %v559
    %v576 = vadd.s32 %v571, %v573
    %vm577 = vc.u32 %v571, %v573
    %v578 = vadd.s32 %v574, 1
    %v579 = vsel %vm577, %v578, %v574
    %v580 = vadd.s32 %v575, %v579
    %v581 = vadd.s32 %v580, 536870912
    %v582 = vshrl.u32 %v581, 30
    %v583 = vshll.u32 %v582, 30
    %v584 = vsub.s32 %v580, %v583
    %vm585 = vcmp.lt.s32.totalorder %v584, 0
    %v586 = vsub.s32 0, %v584
    %v587 = vsel %vm585, %v586, %v584
    %v588 = vclz %v587
    %v589 = vsub.s32 %v588, 2
    %vm590 = vcmp.gt.s32.totalorder 0, %v589
    %v591 = vsel %vm590, 0, %v589
    %v592 = vsub.s32 32, %v591
    %v593 = vshll.u32 %v584, %v591
    %v594 = vshrl.u32 %v576, %v592
    %v595 = vor.u32 %v593, %v594
    %v596 = vsub.s32 4294967266, %v591
    %v597 = vadd.s32 %v596, 127
    %v598 = vshll.u32 %v597, 23
    %v599 = vor.u32 4788187, %v598
    %v600 = vand.u32 2147483647, %v599
    %v602 = vcvt.s32.f32 %v595
    %v603 = vmul.f32 %v602, %v600
    %v604 = vxor.u32 %v603, 2147483648
    %v605 = vsel %vm522, %v604, %v603
    %v606 = vsub.s32 4, %v582
    %v607 = vsel %vm522, %v606, %v582
    %v608 = vsel %vm521, %v209, %v605
    %v609 = vsel %vm521, 0, %v607
    %v610 = vcosq.f32.pop %v608
    %v611 = vsinq.f32.pop %v608
    %vm612 = vweird.f32 %v209
    %v613 = vand.u32 %v609, 3
    %vm614 = vcmp.lt.s32.totalorder %v613, 2
    %vm615 = vcmp.eq.s32.totalorder %v613, 0
    %v616 = vxor.u32 %v611, 2147483648
    %v617 = vsel %vm615, %v610, %v616
    %vm618 = vcmp.eq.s32.totalorder %v613, 2
    %v619 = vxor.u32 %v610, 2147483648
    %v620 = vsel %vm618, %v619, %v611
    %v621 = vsel %vm614, %v617, %v620
    %v622 = vsel %vm612, nan, %v621
    %s623 = scalar_lea.vmem %s4, 4
    %v624 = vld [vmem:[%s623] sm:$0xf]
    %v626 = vlaneseq
    %v627 = vshrl.u32 %v626, 7
    %v628 = vsub.s32 0, %v627
    %v629 = vrot.slane %v624, %v628
    %v630 = vlaneseq
    %v631 = vshrl.u32 %v630, 7
    %v632 = vsub.s32 1, %v631
    %v633 = vrot.slane %v624, %v632
    %v634 = vlaneseq
    %v635 = vshrl.u32 %v634, 7
    %v636 = vsub.s32 2, %v635
    %v637 = vrot.slane %v624, %v636
    %v638 = vlaneseq
    %v639 = vshrl.u32 %v638, 7
    %v640 = vsub.s32 3, %v639
    %v641 = vrot.slane %v624, %v640
    %v647 = vsel %vm65, %v33, 0
    %649 = vmatprep.subr.mxu0 %v36
    %650 = vmatpush1.msra.mxu0 %v35
    %651 = vmatprep.subr.mxu0 %v40
    %652 = vmatpush1.msra.mxu0 %v39
    %653 = vmatprep.subr.mxu0 0.0
    %654 = vmatpush1.msra.mxu0 0.0
    %655 = vmatprep.subr.mxu0 0.0
    %656 = vmatpush1.msra.mxu0 0.0
    %657 = vmatprep.subr.mxu0 0.0
    %658 = vmatpush1.msra.mxu0 0.0
    %659 = vmatprep.subr.mxu0 0.0
    %660 = vmatpush1.msra.mxu0 0.0
    %661 = vmatprep.subr.mxu0 0.0
    %662 = vmatpush1.msra.mxu0 0.0
    %663 = vmatprep.subr.mxu0 0.0
    %664 = vmatpush1.msra.mxu0 0.0
    %665 = vmatprep.subr.mxu0 0.0
    %666 = vmatpush1.msra.mxu0 0.0
    %667 = vmatprep.subr.mxu0 0.0
    %668 = vmatpush1.msra.mxu0 0.0
    %669 = vmatprep.subr.mxu0 0.0
    %670 = vmatpush1.msra.mxu0 0.0
    %671 = vmatprep.subr.mxu0 0.0
    %672 = vmatpush1.msra.mxu0 0.0
    %673 = vmatprep.subr.mxu0 0.0
    %674 = vmatpush1.msra.mxu0 0.0
    %675 = vmatprep.subr.mxu0 0.0
    %676 = vmatpush1.msra.mxu0 0.0
    %677 = vmatprep.subr.mxu0 0.0
    %678 = vmatpush1.msra.mxu0 0.0
    %679 = vmatprep.subr.mxu0 0.0
    %680 = vmatpush1.msra.mxu0 0.0
    %681 = vmatprep.subr.mxu0 0.0
    %682 = vmatpush1.msra.mxu0 0.0
    %683 = vmatprep.subr.mxu0 0.0
    %684 = vmatpush1.msra.mxu0 0.0
    %685 = vmatprep.subr.mxu0 0.0
    %686 = vmatpush1.msra.mxu0 0.0
    %687 = vmatprep.subr.mxu0 0.0
    %688 = vmatpush1.msra.mxu0 0.0
    %689 = vmatprep.subr.mxu0 0.0
    %690 = vmatpush1.msra.mxu0 0.0
    %691 = vmatprep.subr.mxu0 0.0
    %692 = vmatpush1.msra.mxu0 0.0
    %693 = vmatprep.subr.mxu0 0.0
    %694 = vmatpush1.msra.mxu0 0.0
    %695 = vmatprep.subr.mxu0 0.0
    %696 = vmatpush1.msra.mxu0 0.0
    %697 = vmatprep.subr.mxu0 0.0
    %698 = vmatpush1.msra.mxu0 0.0
    %699 = vmatprep.subr.mxu0 0.0
    %700 = vmatpush1.msra.mxu0 0.0
    %701 = vmatprep.subr.mxu0 0.0
    %702 = vmatpush1.msra.mxu0 0.0
    %703 = vmatprep.subr.mxu0 0.0
    %704 = vmatpush1.msra.mxu0 0.0
    %705 = vmatprep.subr.mxu0 0.0
    %706 = vmatpush1.msra.mxu0 0.0
    %707 = vmatprep.subr.mxu0 0.0
    %708 = vmatpush1.msra.mxu0 0.0
    %709 = vmatprep.subr.mxu0 0.0
    %710 = vmatpush1.msra.mxu0 0.0
    %711 = vmatprep.subr.mxu0 0.0
    %712 = vmatpush1.msra.mxu0 0.0
    %713 = vmatprep.mubr.f32.mxu0 0.0
    %714 = vmatmul.mubr.f32.gmra.mrb[0].mxu0 %v647
    %v715 = vpop.f32.mrb[0].mxu0
    %v716 = vadd.f32 %v629, %v715
    %v717 = vpop.f32.mrb[0].mxu0
    %v718 = vadd.f32 %v633, %v717
    %719 = vdwg.mxu0
    %720 = vmatprep.subr.mxu0 %v38
    %721 = vmatpush1.msra.mxu0 %v37
    %722 = vmatprep.subr.mxu0 %v42
    %723 = vmatpush1.msra.mxu0 %v41
    %724 = vmatprep.subr.mxu0 0.0
    %725 = vmatpush1.msra.mxu0 0.0
    %726 = vmatprep.subr.mxu0 0.0
    %727 = vmatpush1.msra.mxu0 0.0
    %728 = vmatprep.subr.mxu0 0.0
    %729 = vmatpush1.msra.mxu0 0.0
    %730 = vmatprep.subr.mxu0 0.0
    %731 = vmatpush1.msra.mxu0 0.0
    %732 = vmatprep.subr.mxu0 0.0
    %733 = vmatpush1.msra.mxu0 0.0
    %734 = vmatprep.subr.mxu0 0.0
    %735 = vmatpush1.msra.mxu0 0.0
    %736 = vmatprep.subr.mxu0 0.0
    %737 = vmatpush1.msra.mxu0 0.0
    %738 = vmatprep.subr.mxu0 0.0
    %739 = vmatpush1.msra.mxu0 0.0
    %740 = vmatprep.subr.mxu0 0.0
    %741 = vmatpush1.msra.mxu0 0.0
    %742 = vmatprep.subr.mxu0 0.0
    %743 = vmatpush1.msra.mxu0 0.0
    %744 = vmatprep.subr.mxu0 0.0
    %745 = vmatpush1.msra.mxu0 0.0
    %746 = vmatprep.subr.mxu0 0.0
    %747 = vmatpush1.msra.mxu0 0.0
    %748 = vmatprep.subr.mxu0 0.0
    %749 = vmatpush1.msra.mxu0 0.0
    %750 = vmatprep.subr.mxu0 0.0
    %751 = vmatpush1.msra.mxu0 0.0
    %752 = vmatprep.subr.mxu0 0.0
    %753 = vmatpush1.msra.mxu0 0.0
    %754 = vmatprep.subr.mxu0 0.0
    %755 = vmatpush1.msra.mxu0 0.0
    %756 = vmatprep.subr.mxu0 0.0
    %757 = vmatpush1.msra.mxu0 0.0
    %758 = vmatprep.subr.mxu0 0.0
    %759 = vmatpush1.msra.mxu0 0.0
    %760 = vmatprep.subr.mxu0 0.0
    %761 = vmatpush1.msra.mxu0 0.0
    %762 = vmatprep.subr.mxu0 0.0
    %763 = vmatpush1.msra.mxu0 0.0
    %764 = vmatprep.subr.mxu0 0.0
    %765 = vmatpush1.msra.mxu0 0.0
    %766 = vmatprep.subr.mxu0 0.0
    %767 = vmatpush1.msra.mxu0 0.0
    %768 = vmatprep.subr.mxu0 0.0
    %769 = vmatpush1.msra.mxu0 0.0
    %770 = vmatprep.subr.mxu0 0.0
    %771 = vmatpush1.msra.mxu0 0.0
    %772 = vmatprep.subr.mxu0 0.0
    %773 = vmatpush1.msra.mxu0 0.0
    %774 = vmatprep.subr.mxu0 0.0
    %775 = vmatpush1.msra.mxu0 0.0
    %776 = vmatprep.subr.mxu0 0.0
    %777 = vmatpush1.msra.mxu0 0.0
    %778 = vmatprep.subr.mxu0 0.0
    %779 = vmatpush1.msra.mxu0 0.0
    %780 = vmatprep.subr.mxu0 0.0
    %781 = vmatpush1.msra.mxu0 0.0
    %782 = vmatprep.subr.mxu0 0.0
    %783 = vmatpush1.msra.mxu0 0.0
    %784 = vmatprep.mubr.f32.mxu0 0.0
    %785 = vmatmul.mubr.f32.gmra.mrb[0].mxu0 %v647
    %v786 = vpop.f32.mrb[0].mxu0
    %v787 = vadd.f32 %v637, %v786
    %v788 = vpop.f32.mrb[0].mxu0
    %v789 = vadd.f32 %v641, %v788
    %790 = vdwg.mxu0
    %v791 = vand.u32 2147483647, %v716
    %vm792 = vcmp.le.f32.partialorder %v791, 0.7853982
    %vm793 = vcmp.lt.s32.totalorder %v716, 0
    %v794 = vand.u32 %v716, 2139095040
    %v795 = vshrl.u32 %v794, 23
    %v796 = vsub.s32 %v795, 127
    %v797 = vand.u32 2147483647, %v716
    %v798 = vand.u32 %v797, 8388607
    %v799 = vor.u32 %v798, 8388608
    %v800 = vsub.s32 0, %v799
    %v801 = vadd.s32 %v796, 1
    %vm802 = vcmp.gt.s32.totalorder %v801, 0
    %v803 = vsel %vm802, %v801, 0
    %v804 = vshrl.u32 %v803, 5
    %v805 = vand.u32 %v803, 31
    %v806 = vsub.s32 32, %v805
    %v807 = vshrl.u32 683565275, %v806
    %v808 = vshll.u32 683565275, %v805
    %v809 = vshrl.u32 2475754826, %v806
    %v810 = vor.u32 %v808, %v809
    %v811 = vshll.u32 2475754826, %v805
    %v812 = vshrl.u32 2131351028, %v806
    %v813 = vor.u32 %v811, %v812
    %v814 = vshll.u32 2131351028, %v805
    %v815 = vshrl.u32 2102212464, %v806
    %v816 = vor.u32 %v814, %v815
    %v817 = vshll.u32 2102212464, %v805
    %v818 = vshrl.u32 920167782, %v806
    %v819 = vor.u32 %v817, %v818
    %v820 = vshll.u32 920167782, %v805
    %v821 = vshrl.u32 1326507024, %v806
    %v822 = vor.u32 %v820, %v821
    %vm823 = vcmp.lt.s32.totalorder %v804, 1
    %vm824 = vcmp.lt.s32.totalorder %v804, 2
    %vm825 = vcmp.lt.s32.totalorder %v804, 3
    %vm826 = vcmp.lt.s32.totalorder %v804, 4
    %v827 = vsel %vm823, %v807, %v810
    %v828 = vsel %vm826, %v816, 2102212464
    %v829 = vsel %vm825, %v813, %v828
    %v830 = vsel %vm824, %v827, %v829
    %v831 = vsel %vm823, %v810, %v813
    %v832 = vsel %vm826, %v819, 920167782
    %v833 = vsel %vm825, %v816, %v832
    %v834 = vsel %vm824, %v831, %v833
    %v835 = vsel %vm823, %v813, %v816
    %v836 = vsel %vm826, %v822, 1326507024
    %v837 = vsel %vm825, %v819, %v836
    %v838 = vsel %vm824, %v835, %v837
    %v839 = vshll.u32 %v799, 8
    %v840 = vmul.u32.u64.compose %v839, %v838
    %v841 = vextract.low.u32 %v840
    %v842 = vextract.high.u32 %v840
    %v843 = vmul.u32.u64.compose %v839, %v834
    %v844 = vextract.low.u32 %v843
    %v845 = vextract.high.u32 %v843
    %v846 = vmul.u32 %v839, %v830
    %v847 = vadd.s32 %v842, %v844
    %vm848 = vc.u32 %v842, %v844
    %v849 = vadd.s32 %v845, 1
    %v850 = vsel %vm848, %v849, %v845
    %v851 = vadd.s32 %v846, %v850
    %v852 = vadd.s32 %v851, 536870912
    %v853 = vshrl.u32 %v852, 30
    %v854 = vshll.u32 %v853, 30
    %v855 = vsub.s32 %v851, %v854
    %vm856 = vcmp.lt.s32.totalorder %v855, 0
    %v857 = vsub.s32 0, %v855
    %v858 = vsel %vm856, %v857, %v855
    %v859 = vclz %v858
    %v860 = vsub.s32 %v859, 2
    %vm861 = vcmp.gt.s32.totalorder 0, %v860
    %v862 = vsel %vm861, 0, %v860
    %v863 = vsub.s32 32, %v862
    %v864 = vshll.u32 %v855, %v862
    %v865 = vshrl.u32 %v847, %v863
    %v866 = vor.u32 %v864, %v865
    %v867 = vsub.s32 4294967266, %v862
    %v868 = vadd.s32 %v867, 127
    %v869 = vshll.u32 %v868, 23
    %v870 = vor.u32 4788187, %v869
    %v871 = vand.u32 2147483647, %v870
    %v873 = vcvt.s32.f32 %v866
    %v874 = vmul.f32 %v873, %v871
    %v875 = vxor.u32 %v874, 2147483648
    %v876 = vsel %vm793, %v875, %v874
    %v877 = vsub.s32 4, %v853
    %v878 = vsel %vm793, %v877, %v853
    %v879 = vsel %vm792, %v716, %v876
    %v880 = vsel %vm792, 0, %v878
    %v881 = vcosq.f32.pop %v879
    %v882 = vsinq.f32.pop %v879
    %vm883 = vweird.f32 %v716
    %v884 = vand.u32 %v880, 3
    %vm885 = vcmp.lt.s32.totalorder %v884, 2
    %vm886 = vcmp.eq.s32.totalorder %v884, 0
    %v887 = vxor.u32 %v882, 2147483648
    %v888 = vsel %vm886, %v881, %v887
    %vm889 = vcmp.eq.s32.totalorder %v884, 2
    %v890 = vxor.u32 %v881, 2147483648
    %v891 = vsel %vm889, %v890, %v882
    %v892 = vsel %vm885, %v888, %v891
    %v893 = vsel %vm883, nan, %v892
    %v894 = vand.u32 2147483647, %v718
    %vm895 = vcmp.le.f32.partialorder %v894, 0.7853982
    %vm896 = vcmp.lt.s32.totalorder %v718, 0
    %v897 = vand.u32 %v718, 2139095040
    %v898 = vshrl.u32 %v897, 23
    %v899 = vsub.s32 %v898, 127
    %v900 = vand.u32 2147483647, %v718
    %v901 = vand.u32 %v900, 8388607
    %v902 = vor.u32 %v901, 8388608
    %v903 = vsub.s32 0, %v902
    %v904 = vadd.s32 %v899, 1
    %vm905 = vcmp.gt.s32.totalorder %v904, 0
    %v906 = vsel %vm905, %v904, 0
    %v907 = vshrl.u32 %v906, 5
    %v908 = vand.u32 %v906, 31
    %v909 = vsub.s32 32, %v908
    %v910 = vshrl.u32 683565275, %v909
    %v911 = vshll.u32 683565275, %v908
    %v912 = vshrl.u32 2475754826, %v909
    %v913 = vor.u32 %v911, %v912
    %v914 = vshll.u32 2475754826, %v908
    %v915 = vshrl.u32 2131351028, %v909
    %v916 = vor.u32 %v914, %v915
    %v917 = vshll.u32 2131351028, %v908
    %v918 = vshrl.u32 2102212464, %v909
    %v919 = vor.u32 %v917, %v918
    %v920 = vshll.u32 2102212464, %v908
    %v921 = vshrl.u32 920167782, %v909
    %v922 = vor.u32 %v920, %v921
    %v923 = vshll.u32 920167782, %v908
    %v924 = vshrl.u32 1326507024, %v909
    %v925 = vor.u32 %v923, %v924
    %vm926 = vcmp.lt.s32.totalorder %v907, 1
    %vm927 = vcmp.lt.s32.totalorder %v907, 2
    %vm928 = vcmp.lt.s32.totalorder %v907, 3
    %vm929 = vcmp.lt.s32.totalorder %v907, 4
    %v930 = vsel %vm926, %v910, %v913
    %v931 = vsel %vm929, %v919, 2102212464
    %v932 = vsel %vm928, %v916, %v931
    %v933 = vsel %vm927, %v930, %v932
    %v934 = vsel %vm926, %v913, %v916
    %v935 = vsel %vm929, %v922, 920167782
    %v936 = vsel %vm928, %v919, %v935
    %v937 = vsel %vm927, %v934, %v936
    %v938 = vsel %vm926, %v916, %v919
    %v939 = vsel %vm929, %v925, 1326507024
    %v940 = vsel %vm928, %v922, %v939
    %v941 = vsel %vm927, %v938, %v940
    %v942 = vshll.u32 %v902, 8
    %v943 = vmul.u32.u64.compose %v942, %v941
    %v944 = vextract.low.u32 %v943
    %v945 = vextract.high.u32 %v943
    %v946 = vmul.u32.u64.compose %v942, %v937
    %v947 = vextract.low.u32 %v946
    %v948 = vextract.high.u32 %v946
    %v949 = vmul.u32 %v942, %v933
    %v950 = vadd.s32 %v945, %v947
    %vm951 = vc.u32 %v945, %v947
    %v952 = vadd.s32 %v948, 1
    %v953 = vsel %vm951, %v952, %v948
    %v954 = vadd.s32 %v949, %v953
    %v955 = vadd.s32 %v954, 536870912
    %v956 = vshrl.u32 %v955, 30
    %v957 = vshll.u32 %v956, 30
    %v958 = vsub.s32 %v954, %v957
    %vm959 = vcmp.lt.s32.totalorder %v958, 0
    %v960 = vsub.s32 0, %v958
    %v961 = vsel %vm959, %v960, %v958
    %v962 = vclz %v961
    %v963 = vsub.s32 %v962, 2
    %vm964 = vcmp.gt.s32.totalorder 0, %v963
    %v965 = vsel %vm964, 0, %v963
    %v966 = vsub.s32 32, %v965
    %v967 = vshll.u32 %v958, %v965
    %v968 = vshrl.u32 %v950, %v966
    %v969 = vor.u32 %v967, %v968
    %v970 = vsub.s32 4294967266, %v965
    %v971 = vadd.s32 %v970, 127
    %v972 = vshll.u32 %v971, 23
    %v973 = vor.u32 4788187, %v972
    %v974 = vand.u32 2147483647, %v973
    %v976 = vcvt.s32.f32 %v969
    %v977 = vmul.f32 %v976, %v974
    %v978 = vxor.u32 %v977, 2147483648
    %v979 = vsel %vm896, %v978, %v977
    %v980 = vsub.s32 4, %v956
    %v981 = vsel %vm896, %v980, %v956
    %v982 = vsel %vm895, %v718, %v979
    %v983 = vsel %vm895, 0, %v981
    %v984 = vcosq.f32.pop %v982
    %v985 = vsinq.f32.pop %v982
    %vm986 = vweird.f32 %v718
    %v987 = vand.u32 %v983, 3
    %vm988 = vcmp.lt.s32.totalorder %v987, 2
    %vm989 = vcmp.eq.s32.totalorder %v987, 0
    %v990 = vxor.u32 %v985, 2147483648
    %v991 = vsel %vm989, %v984, %v990
    %vm992 = vcmp.eq.s32.totalorder %v987, 2
    %v993 = vxor.u32 %v984, 2147483648
    %v994 = vsel %vm992, %v993, %v985
    %v995 = vsel %vm988, %v991, %v994
    %v996 = vsel %vm986, nan, %v995
    %v997 = vand.u32 2147483647, %v787
    %vm998 = vcmp.le.f32.partialorder %v997, 0.7853982
    %vm999 = vcmp.lt.s32.totalorder %v787, 0
    %v1000 = vand.u32 %v787, 2139095040
    %v1001 = vshrl.u32 %v1000, 23
    %v1002 = vsub.s32 %v1001, 127
    %v1003 = vand.u32 2147483647, %v787
    %v1004 = vand.u32 %v1003, 8388607
    %v1005 = vor.u32 %v1004, 8388608
    %v1006 = vsub.s32 0, %v1005
    %v1007 = vadd.s32 %v1002, 1
    %vm1008 = vcmp.gt.s32.totalorder %v1007, 0
    %v1009 = vsel %vm1008, %v1007, 0
    %v1010 = vshrl.u32 %v1009, 5
    %v1011 = vand.u32 %v1009, 31
    %v1012 = vsub.s32 32, %v1011
    %v1013 = vshrl.u32 683565275, %v1012
    %v1014 = vshll.u32 683565275, %v1011
    %v1015 = vshrl.u32 2475754826, %v1012
    %v1016 = vor.u32 %v1014, %v1015
    %v1017 = vshll.u32 2475754826, %v1011
    %v1018 = vshrl.u32 2131351028, %v1012
    %v1019 = vor.u32 %v1017, %v1018
    %v1020 = vshll.u32 2131351028, %v1011
    %v1021 = vshrl.u32 2102212464, %v1012
    %v1022 = vor.u32 %v1020, %v1021
    %v1023 = vshll.u32 2102212464, %v1011
    %v1024 = vshrl.u32 920167782, %v1012
    %v1025 = vor.u32 %v1023, %v1024
    %v1026 = vshll.u32 920167782, %v1011
    %v1027 = vshrl.u32 1326507024, %v1012
    %v1028 = vor.u32 %v1026, %v1027
    %vm1029 = vcmp.lt.s32.totalorder %v1010, 1
    %vm1030 = vcmp.lt.s32.totalorder %v1010, 2
    %vm1031 = vcmp.lt.s32.totalorder %v1010, 3
    %vm1032 = vcmp.lt.s32.totalorder %v1010, 4
    %v1033 = vsel %vm1029, %v1013, %v1016
    %v1034 = vsel %vm1032, %v1022, 2102212464
    %v1035 = vsel %vm1031, %v1019, %v1034
    %v1036 = vsel %vm1030, %v1033, %v1035
    %v1037 = vsel %vm1029, %v1016, %v1019
    %v1038 = vsel %vm1032, %v1025, 920167782
    %v1039 = vsel %vm1031, %v1022, %v1038
    %v1040 = vsel %vm1030, %v1037, %v1039
    %v1041 = vsel %vm1029, %v1019, %v1022
    %v1042 = vsel %vm1032, %v1028, 1326507024
    %v1043 = vsel %vm1031, %v1025, %v1042
    %v1044 = vsel %vm1030, %v1041, %v1043
    %v1045 = vshll.u32 %v1005, 8
    %v1046 = vmul.u32.u64.compose %v1045, %v1044
    %v1047 = vextract.low.u32 %v1046
    %v1048 = vextract.high.u32 %v1046
    %v1049 = vmul.u32.u64.compose %v1045, %v1040
    %v1050 = vextract.low.u32 %v1049
    %v1051 = vextract.high.u32 %v1049
    %v1052 = vmul.u32 %v1045, %v1036
    %v1053 = vadd.s32 %v1048, %v1050
    %vm1054 = vc.u32 %v1048, %v1050
    %v1055 = vadd.s32 %v1051, 1
    %v1056 = vsel %vm1054, %v1055, %v1051
    %v1057 = vadd.s32 %v1052, %v1056
    %v1058 = vadd.s32 %v1057, 536870912
    %v1059 = vshrl.u32 %v1058, 30
    %v1060 = vshll.u32 %v1059, 30
    %v1061 = vsub.s32 %v1057, %v1060
    %vm1062 = vcmp.lt.s32.totalorder %v1061, 0
    %v1063 = vsub.s32 0, %v1061
    %v1064 = vsel %vm1062, %v1063, %v1061
    %v1065 = vclz %v1064
    %v1066 = vsub.s32 %v1065, 2
    %vm1067 = vcmp.gt.s32.totalorder 0, %v1066
    %v1068 = vsel %vm1067, 0, %v1066
    %v1069 = vsub.s32 32, %v1068
    %v1070 = vshll.u32 %v1061, %v1068
    %v1071 = vshrl.u32 %v1053, %v1069
    %v1072 = vor.u32 %v1070, %v1071
    %v1073 = vsub.s32 4294967266, %v1068
    %v1074 = vadd.s32 %v1073, 127
    %v1075 = vshll.u32 %v1074, 23
    %v1076 = vor.u32 4788187, %v1075
    %v1077 = vand.u32 2147483647, %v1076
    %v1079 = vcvt.s32.f32 %v1072
    %v1080 = vmul.f32 %v1079, %v1077
    %v1081 = vxor.u32 %v1080, 2147483648
    %v1082 = vsel %vm999, %v1081, %v1080
    %v1083 = vsub.s32 4, %v1059
    %v1084 = vsel %vm999, %v1083, %v1059
    %v1085 = vsel %vm998, %v787, %v1082
    %v1086 = vsel %vm998, 0, %v1084
    %v1087 = vcosq.f32.pop %v1085
    %v1088 = vsinq.f32.pop %v1085
    %vm1089 = vweird.f32 %v787
    %v1090 = vand.u32 %v1086, 3
    %vm1091 = vcmp.lt.s32.totalorder %v1090, 2
    %vm1092 = vcmp.eq.s32.totalorder %v1090, 0
    %v1093 = vxor.u32 %v1088, 2147483648
    %v1094 = vsel %vm1092, %v1087, %v1093
    %vm1095 = vcmp.eq.s32.totalorder %v1090, 2
    %v1096 = vxor.u32 %v1087, 2147483648
    %v1097 = vsel %vm1095, %v1096, %v1088
    %v1098 = vsel %vm1091, %v1094, %v1097
    %v1099 = vsel %vm1089, nan, %v1098
    %v1100 = vand.u32 2147483647, %v789
    %vm1101 = vcmp.le.f32.partialorder %v1100, 0.7853982
    %vm1102 = vcmp.lt.s32.totalorder %v789, 0
    %v1103 = vand.u32 %v789, 2139095040
    %v1104 = vshrl.u32 %v1103, 23
    %v1105 = vsub.s32 %v1104, 127
    %v1106 = vand.u32 2147483647, %v789
    %v1107 = vand.u32 %v1106, 8388607
    %v1108 = vor.u32 %v1107, 8388608
    %v1109 = vsub.s32 0, %v1108
    %v1110 = vadd.s32 %v1105, 1
    %vm1111 = vcmp.gt.s32.totalorder %v1110, 0
    %v1112 = vsel %vm1111, %v1110, 0
    %v1113 = vshrl.u32 %v1112, 5
    %v1114 = vand.u32 %v1112, 31
    %v1115 = vsub.s32 32, %v1114
    %v1116 = vshrl.u32 683565275, %v1115
    %v1117 = vshll.u32 683565275, %v1114
    %v1118 = vshrl.u32 2475754826, %v1115
    %v1119 = vor.u32 %v1117, %v1118
    %v1120 = vshll.u32 2475754826, %v1114
    %v1121 = vshrl.u32 2131351028, %v1115
    %v1122 = vor.u32 %v1120, %v1121
    %v1123 = vshll.u32 2131351028, %v1114
    %v1124 = vshrl.u32 2102212464, %v1115
    %v1125 = vor.u32 %v1123, %v1124
    %v1126 = vshll.u32 2102212464, %v1114
    %v1127 = vshrl.u32 920167782, %v1115
    %v1128 = vor.u32 %v1126, %v1127
    %v1129 = vshll.u32 920167782, %v1114
    %v1130 = vshrl.u32 1326507024, %v1115
    %v1131 = vor.u32 %v1129, %v1130
    %vm1132 = vcmp.lt.s32.totalorder %v1113, 1
    %vm1133 = vcmp.lt.s32.totalorder %v1113, 2
    %vm1134 = vcmp.lt.s32.totalorder %v1113, 3
    %vm1135 = vcmp.lt.s32.totalorder %v1113, 4
    %v1136 = vsel %vm1132, %v1116, %v1119
    %v1137 = vsel %vm1135, %v1125, 2102212464
    %v1138 = vsel %vm1134, %v1122, %v1137
    %v1139 = vsel %vm1133, %v1136, %v1138
    %v1140 = vsel %vm1132, %v1119, %v1122
    %v1141 = vsel %vm1135, %v1128, 920167782
    %v1142 = vsel %vm1134, %v1125, %v1141
    %v1143 = vsel %vm1133, %v1140, %v1142
    %v1144 = vsel %vm1132, %v1122, %v1125
    %v1145 = vsel %vm1135, %v1131, 1326507024
    %v1146 = vsel %vm1134, %v1128, %v1145
    %v1147 = vsel %vm1133, %v1144, %v1146
    %v1148 = vshll.u32 %v1108, 8
    %v1149 = vmul.u32.u64.compose %v1148, %v1147
    %v1150 = vextract.low.u32 %v1149
    %v1151 = vextract.high.u32 %v1149
    %v1152 = vmul.u32.u64.compose %v1148, %v1143
    %v1153 = vextract.low.u32 %v1152
    %v1154 = vextract.high.u32 %v1152
    %v1155 = vmul.u32 %v1148, %v1139
    %v1156 = vadd.s32 %v1151, %v1153
    %vm1157 = vc.u32 %v1151, %v1153
    %v1158 = vadd.s32 %v1154, 1
    %v1159 = vsel %vm1157, %v1158, %v1154
    %v1160 = vadd.s32 %v1155, %v1159
    %v1161 = vadd.s32 %v1160, 536870912
    %v1162 = vshrl.u32 %v1161, 30
    %v1163 = vshll.u32 %v1162, 30
    %v1164 = vsub.s32 %v1160, %v1163
    %vm1165 = vcmp.lt.s32.totalorder %v1164, 0
    %v1166 = vsub.s32 0, %v1164
    %v1167 = vsel %vm1165, %v1166, %v1164
    %v1168 = vclz %v1167
    %v1169 = vsub.s32 %v1168, 2
    %vm1170 = vcmp.gt.s32.totalorder 0, %v1169
    %v1171 = vsel %vm1170, 0, %v1169
    %v1172 = vsub.s32 32, %v1171
    %v1173 = vshll.u32 %v1164, %v1171
    %v1174 = vshrl.u32 %v1156, %v1172
    %v1175 = vor.u32 %v1173, %v1174
    %v1176 = vsub.s32 4294967266, %v1171
    %v1177 = vadd.s32 %v1176, 127
    %v1178 = vshll.u32 %v1177, 23
    %v1179 = vor.u32 4788187, %v1178
    %v1180 = vand.u32 2147483647, %v1179
    %v1182 = vcvt.s32.f32 %v1175
    %v1183 = vmul.f32 %v1182, %v1180
    %v1184 = vxor.u32 %v1183, 2147483648
    %v1185 = vsel %vm1102, %v1184, %v1183
    %v1186 = vsub.s32 4, %v1162
    %v1187 = vsel %vm1102, %v1186, %v1162
    %v1188 = vsel %vm1101, %v789, %v1185
    %v1189 = vsel %vm1101, 0, %v1187
    %v1190 = vcosq.f32.pop %v1188
    %v1191 = vsinq.f32.pop %v1188
    %vm1192 = vweird.f32 %v789
    %v1193 = vand.u32 %v1189, 3
    %vm1194 = vcmp.lt.s32.totalorder %v1193, 2
    %vm1195 = vcmp.eq.s32.totalorder %v1193, 0
    %v1196 = vxor.u32 %v1191, 2147483648
    %v1197 = vsel %vm1195, %v1190, %v1196
    %vm1198 = vcmp.eq.s32.totalorder %v1193, 2
    %v1199 = vxor.u32 %v1190, 2147483648
    %v1200 = vsel %vm1198, %v1199, %v1191
    %v1201 = vsel %vm1194, %v1197, %v1200
    %v1202 = vsel %vm1192, nan, %v1201
    %v1203 = vsub.f32 %v313, %v893
    %v1204 = vsub.f32 %v416, %v996
    %v1205 = vsub.f32 %v519, %v1099
    %v1206 = vsub.f32 %v622, %v1202
    %v1207 = vrot.slane %v1203, 4
    %v1208 = vadd.f32 %v1203, %v1207
    %v1209 = vrot.slane %v1208, 2
    %v1210 = vadd.f32 %v1208, %v1209
    %v1211 = vrot.slane %v1210, 1
    %v1212 = vadd.f32 %v1210, %v1211
    %v1213 = vrot.slane %v1204, 4
    %v1214 = vadd.f32 %v1204, %v1213
    %v1215 = vrot.slane %v1214, 2
    %v1216 = vadd.f32 %v1214, %v1215
    %v1217 = vrot.slane %v1216, 1
    %v1218 = vadd.f32 %v1216, %v1217
    %v1219 = vrot.slane %v1205, 4
    %v1220 = vadd.f32 %v1205, %v1219
    %v1221 = vrot.slane %v1220, 2
    %v1222 = vadd.f32 %v1220, %v1221
    %v1223 = vrot.slane %v1222, 1
    %v1224 = vadd.f32 %v1222, %v1223
    %v1225 = vrot.slane %v1206, 4
    %v1226 = vadd.f32 %v1206, %v1225
    %v1227 = vrot.slane %v1226, 2
    %v1228 = vadd.f32 %v1226, %v1227
    %v1229 = vrot.slane %v1228, 1
    %v1230 = vadd.f32 %v1228, %v1229
    %v1231 = vlaneseq
    %v1232 = vand.u32 %v1231, 127
    %v1233 = vadd.s32 %v1232, 128
    %v1234 = vadd.s32 %v1232, 256
    %v1235 = vadd.s32 %v1232, 384
    %vm1236 = vcmp.lt.s32.totalorder %v1232, 500
    %vm1237 = vcmp.lt.s32.totalorder %v1233, 500
    %vm1238 = vcmp.lt.s32.totalorder %v1234, 500
    %vm1239 = vcmp.lt.s32.totalorder %v1235, 500
    %v1240 = vmul.f32 %v1212, %v1212
    %v1241 = vmul.f32 %v1218, %v1218
    %v1242 = vmul.f32 %v1224, %v1224
    %v1243 = vmul.f32 %v1230, %v1230
    %v1244 = vsel %vm1236, %v1240, 0.0
    %v1245 = vsel %vm1237, %v1241, 0.0
    %v1246 = vsel %vm1238, %v1242, 0.0
    %v1247 = vsel %vm1239, %v1243, 0.0
    %s1248 = sld [smem:[#allocation2]]
    %vm1249 = vcmask 1040384
    %v1250 = vsel %vm1249, %v1244, 0.0
    %v1251 = vsel %vm1249, %v1245, 0.0
    %v1252 = vadd.f32 %v1250, %v1251
    %v1253 = vsel %vm1249, %v1246, 0.0
    %v1254 = vadd.f32 %v1252, %v1253
    %v1255 = vsel %vm1249, %v1247, 0.0
    %v1256 = vadd.f32 %v1254, %v1255
    %1257 = vadd.xlane.f32.xlu0 %v1256
    %v1258 = vpop.xlane.xlu0 %1257
    %v1259 = vrot.slane %v1258, 4
    %v1260 = vadd.f32 %v1258, %v1259
    %v1261 = vrot.slane %v1260, 2
    %v1262 = vadd.f32 %v1260, %v1261
    %v1263 = vrot.slane %v1262, 1
    %v1264 = vadd.f32 %v1262, %v1263
    %s1265 = vtos %v1264
    %s1266 = smul.f32 %s1248, %s1265
    %s1267 = scalar_lea.smem [#allocation3], 0
    %1268 = sst [smem:[%s1267]] %s1266
    // Predicated region
    $region22: #{_loss_wae_impl.3} parent=1 // pred_check
      _
    $region23: #{_loss_wae_impl.3} parent=1 // pred_check_branch
      %1270 = sbr.rel (0) target = $region25
    $region24: #{_loss_wae_impl.3} parent=1 // pred_region
      %s1272 = ssub.s32 16, 16
      %1273 = vsyncadd [#allocation4], %s1272
      %1276 = dma.smem_to_hbm [#allocation3], 16, %s5, [#allocation4]
    $region25: #{_loss_wae_impl.3} parent=1 // pred_fallthru
      _
    // Predicated region
    $region26: #{_loss_wae_impl.3} parent=1 // pred_check
      _
    $region27: #{_loss_wae_impl.3} parent=1 // pred_check_branch
      %1278 = sbr.rel (0) target = $region29
    $region28: #{_loss_wae_impl.3} parent=1 // pred_region
      %1279 = dma.done [#allocation4], 16
    $region29: #{_loss_wae_impl.3} parent=1 // pred_fallthru
      _
    %1280 = sfence
    %1281 = vsyncpa [#allocation4], 1

</llo_original>
